<compile_context>
chip_gen: v6e
topology: v6e:2x2x1
jax: 0.10.0
libtpu: 0.0.40
codegen_flags: <defaults>
</compile_context>

<pallas_src>
import functools

import jax
import jax.numpy as jnp
from jax.experimental import pallas as pl
from jax.experimental.pallas import tpu as pltpu

_LANE = 128


def _stat_pool_kernel(x_ref, *refs, stddev, unbiased, eps, total_t, t_tile):
    if stddev:
        mean_ref, std_ref, sum_ref, ssq_ref = refs
    else:
        mean_ref, sum_ref = refs
        std_ref = ssq_ref = None

    k = pl.program_id(1)
    n_t = pl.cdiv(total_t, t_tile)            # static python int
    lane_accum = (t_tile % _LANE == 0)        # lane-wide accumulator path
    has_tail = (total_t % t_tile) != 0

    @pl.when(k == 0)
    def _init():
        sum_ref[...] = jnp.zeros_like(sum_ref)
        if stddev:
            ssq_ref[...] = jnp.zeros_like(ssq_ref)

    # Per-tile cast only; accumulators are the only persistent fp32 state.
    x = x_ref[...].astype(jnp.float32)        # (b_tile, C, t_tile)

    def _partial_sums(xv):
        if lane_accum:
            # Vreg-aligned lane chunks: pure VPU adds, no XLU, no relayout.
            s = xv[:, :, 0:_LANE]
            q = s * s if stddev else None
            for j in range(1, t_tile // _LANE):
                c = xv[:, :, j * _LANE:(j + 1) * _LANE]
                s = s + c
                if stddev:
                    q = q + c * c
            return s, q
        # Short-sequence path (t_tile == total_t < 128): single step, direct reduce.
        s = jnp.sum(xv, axis=-1, keepdims=True)
        q = jnp.sum(xv * xv, axis=-1, keepdims=True) if stddev else None
        return s, q

    def _accumulate(xv):
        s, q = _partial_sums(xv)
        sum_ref[...] += s
        if stddev:
            ssq_ref[...] += q

    def _masked(xv):
        # Lane-only iota broadcast against the tile (no full 3-D iota).
        lane = jax.lax.broadcasted_iota(jnp.int32, (1, 1, t_tile), 2)
        valid = (k * t_tile + lane) < total_t
        return jnp.where(valid, xv, 0.0)

    if not has_tail:
        _accumulate(x)
    elif n_t == 1:
        _accumulate(_masked(x))
    else:
        @pl.when(k < n_t - 1)
        def _acc_full():
            _accumulate(x)

        @pl.when(k == n_t - 1)
        def _acc_tail():
            _accumulate(_masked(x))

    @pl.when(k == n_t - 1)
    def _finalize():
        n = float(total_t)
        total_sum = jnp.sum(sum_ref[...], axis=-1, keepdims=True)   # (b,C,1)
        mean = total_sum * (1.0 / n)
        mean_ref[...] = mean.astype(mean_ref.dtype)
        if stddev:
            denom = float(total_t - 1) if (unbiased and total_t > 1) else n
            total_ssq = jnp.sum(ssq_ref[...], axis=-1, keepdims=True)
            # sum((x - mean)^2) == sum(x^2) - n * mean^2
            var = (total_ssq - n * mean * mean) * (1.0 / denom)
            std_ref[...] = jnp.sqrt(jnp.maximum(var, eps)).astype(std_ref.dtype)


def _choose_tiles(B, C, T, itemsize, target_bytes, max_t_tile):
    """Pick (b_tile, t_tile, n_b, n_t).  Frame tile grows first (long HBM
    bursts), then batch; batch blocks kept >= 2 when B > 1 (v7x megacore)."""
    if T < _LANE:
        t_tile = T                               # single short tile, direct reduce
    else:
        t_floor = (T // _LANE) * _LANE
        min_t = 1024 if itemsize <= 2 else 512   # keep contiguous bursts >= 2 KiB
        budget_t = max(_LANE, ((target_bytes // max(1, C * itemsize)) // _LANE) * _LANE)
        t_tile = min(max(budget_t, min_t), max_t_tile, t_floor)
    n_t = pl.cdiv(T, t_tile)

    step_bytes = C * t_tile * itemsize
    b_budget = max(1, target_bytes // step_bytes)
    b_cap = B if B == 1 else max(1, B // 2)      # keep >=2 batch blocks when B > 1
    b_tile = max(1, min(b_budget, b_cap, B))
    n_b = pl.cdiv(B, b_tile)
    return int(b_tile), int(t_tile), int(n_b), int(n_t)


def statistics_pooling(x, *, stddev=True, unbiased=False, eps=1e-6,
                       target_bytes=4 << 20, max_t_tile=8192):
    """Pallas implementation of StatisticsPooling.forward.

    x: [B, C, T] float array. Returns [B, 2C, 1] (stddev=True) or [B, C, 1].
    """
    assert x.ndim == 3
    B, C, T = x.shape
    itemsize = jnp.dtype(x.dtype).itemsize

    b_tile, t_tile, n_b, n_t = _choose_tiles(B, C, T, itemsize, target_bytes, max_t_tile)
    acc_w = _LANE if (t_tile % _LANE == 0) else 1

    kernel = functools.partial(
        _stat_pool_kernel,
        stddev=stddev, unbiased=unbiased, eps=eps, total_t=T, t_tile=t_tile,
    )

    out_shape = [jax.ShapeDtypeStruct((B, C, 1), x.dtype)]
    out_specs = [pl.BlockSpec((b_tile, C, 1), lambda b, k: (b, 0, 0))]
    scratch_shapes = [pltpu.VMEM((b_tile, C, acc_w), jnp.float32)]
    if stddev:
        out_shape.append(jax.ShapeDtypeStruct((B, C, 1), x.dtype))
        out_specs.append(pl.BlockSpec((b_tile, C, 1), lambda b, k: (b, 0, 0)))
        scratch_shapes.append(pltpu.VMEM((b_tile, C, acc_w), jnp.float32))

    outs = pl.pallas_call(
        kernel,
        out_shape=tuple(out_shape),
        grid_spec=pltpu.PrefetchScalarGridSpec(
            num_scalar_prefetch=0,
            grid=(n_b, n_t),
            in_specs=[pl.BlockSpec((b_tile, C, t_tile), lambda b, k: (b, 0, k))],
            out_specs=tuple(out_specs),
            scratch_shapes=scratch_shapes,
        ),
        compiler_params=pltpu.CompilerParams(
            dimension_semantics=("parallel", "arbitrary"),
            vmem_limit_bytes=32 << 20,
        ),
    )(x)

    if stddev:
        mean_out, std_out = outs
        return jnp.concatenate([mean_out, std_out], axis=1)   # (B, 2C, 1)
    return outs[0]


def _reference(x, *, stddev=True, unbiased=False, eps=1e-6):
    counts = x.shape[2]
    mean = jnp.sum(x, axis=2, keepdims=True) / counts
    if not stddev:
        return mean
    denom = counts - 1 if (unbiased and counts > 1) else counts
    var = jnp.sum((x - mean) ** 2, axis=2, keepdims=True) / denom
    std = jnp.sqrt(jnp.maximum(var, eps))
    return jnp.concatenate([mean, std], axis=1)


if __name__ == "__main__":
    key = jax.random.PRNGKey(0)
    k1, k2 = jax.random.split(key)

    # Canonical small shape: [batch, channels(=input_dim), frames].
    B, C, T = 2, 4, 16
    x = jax.random.normal(k1, (B, C, T), dtype=jnp.float32)

    out = jax.block_until_ready(statistics_pooling(x))
    ref = _reference(x)
    assert out.shape == (B, 2 * C, 1), out.shape
    assert jnp.allclose(out, ref, atol=1e-5, rtol=1e-5)

    # Frame-tiled reduction with a ragged (masked) tail, default tile choice.
    B2, C2, T2 = 2, 4, 300
    x2 = jax.random.normal(k2, (B2, C2, T2), dtype=jnp.float32)
    out2 = jax.block_until_ready(statistics_pooling(x2))
    assert jnp.allclose(out2, _reference(x2), atol=1e-4, rtol=1e-4)

    # Force the multi-tile accumulation hot loop (3 frame tiles + masked tail).
    out2b = jax.block_until_ready(statistics_pooling(x2, max_t_tile=128))
    assert jnp.allclose(out2b, _reference(x2), atol=1e-4, rtol=1e-4)

    # stddev=False and unbiased=True variants.
    out3 = jax.block_until_ready(statistics_pooling(x, stddev=False))
    assert out3.shape == (B, C, 1)
    assert jnp.allclose(out3, _reference(x, stddev=False), atol=1e-5, rtol=1e-5)

    out4 = jax.block_until_ready(statistics_pooling(x2, unbiased=True, max_t_tile=128))
    assert jnp.allclose(out4, _reference(x2, unbiased=True), atol=1e-4, rtol=1e-4)

    print("KERNEL_OK")
</pallas_src>

<mosaic_0001>
module attributes {stable_mosaic.version = 11 : i64} {
  func.func @_stat_pool_kernel(%arg0: i32, %arg1: i32, %arg2: memref<1x4x16xf32, #tpu.memory_space<vmem>>, %arg3: memref<1x4x1xf32, #tpu.memory_space<vmem>>, %arg4: memref<1x4x1xf32, #tpu.memory_space<vmem>>, %arg5: memref<1x4x1xf32, #tpu.memory_space<vmem>>, %arg6: memref<1x4x1xf32, #tpu.memory_space<vmem>>) attributes {dimension_semantics = [#tpu.dimension_semantics<parallel>, #tpu.dimension_semantics<arbitrary>], iteration_bounds = array<i64: 2, 1>, scalar_prefetch = 0 : i64, scratch_operands = 2 : i64, tpu.core_type = #tpu.core_type<tc>, window_params = [{transform_indices = @transform_0, window_bounds = array<i64: 1, 4, 16>}, {transform_indices = @transform_1, window_bounds = array<i64: 1, 4, 1>}, {transform_indices = @transform_2, window_bounds = array<i64: 1, 4, 1>}]} {
    %c0_i32 = arith.constant 0 : i32
    %0 = arith.cmpi eq, %arg1, %c0_i32 : i32
    %1 = arith.extui %0 : i1 to i32
    %c0_i32_0 = arith.constant 0 : i32
    %2 = arith.cmpi ne, %1, %c0_i32_0 : i32
    scf.if %2 {
      %cst_18 = arith.constant 0.000000e+00 : f32
      %18 = vector.broadcast %cst_18 : f32 to vector<1x4x1xf32>
      %c0_19 = arith.constant 0 : index
      %c0_20 = arith.constant 0 : index
      %c0_21 = arith.constant 0 : index
      %19 = vector.load %arg5[%c0_19, %c0_20, %c0_21] : memref<1x4x1xf32, #tpu.memory_space<vmem>>, vector<1x4x1xf32>
      tpu.vector_store %arg5[%c0_19, %c0_20, %c0_21], %18 {strides = array<i32>} : memref<1x4x1xf32, #tpu.memory_space<vmem>>, vector<1x4x1xf32>,
      %cst_22 = arith.constant 0.000000e+00 : f32
      %20 = vector.broadcast %cst_22 : f32 to vector<1x4x1xf32>
      %c0_23 = arith.constant 0 : index
      %c0_24 = arith.constant 0 : index
      %c0_25 = arith.constant 0 : index
      %21 = vector.load %arg6[%c0_23, %c0_24, %c0_25] : memref<1x4x1xf32, #tpu.memory_space<vmem>>, vector<1x4x1xf32>
      tpu.vector_store %arg6[%c0_23, %c0_24, %c0_25], %20 {strides = array<i32>} : memref<1x4x1xf32, #tpu.memory_space<vmem>>, vector<1x4x1xf32>,
    } else {
    }
    %c0 = arith.constant 0 : index
    %c0_1 = arith.constant 0 : index
    %c0_2 = arith.constant 0 : index
    %3 = vector.load %arg2[%c0, %c0_1, %c0_2] : memref<1x4x16xf32, #tpu.memory_space<vmem>>, vector<1x4x16xf32>
    %cst = arith.constant dense<0.000000e+00> : vector<1x4xf32>
    %4 = vector.multi_reduction <add>, %3, %cst [2] : vector<1x4x16xf32> to vector<1x4xf32>
    %5 = vector.shape_cast %4 : vector<1x4xf32> to vector<1x4x1xf32>
    %6 = arith.mulf %3, %3 : vector<1x4x16xf32>
    %cst_3 = arith.constant dense<0.000000e+00> : vector<1x4xf32>
    %7 = vector.multi_reduction <add>, %6, %cst_3 [2] : vector<1x4x16xf32> to vector<1x4xf32>
    %8 = vector.shape_cast %7 : vector<1x4xf32> to vector<1x4x1xf32>
    %c0_4 = arith.constant 0 : index
    %c0_5 = arith.constant 0 : index
    %c0_6 = arith.constant 0 : index
    %9 = vector.load %arg5[%c0_4, %c0_5, %c0_6] : memref<1x4x1xf32, #tpu.memory_space<vmem>>, vector<1x4x1xf32>
    %10 = arith.addf %9, %5 : vector<1x4x1xf32>
    %c0_7 = arith.constant 0 : index
    %c0_8 = arith.constant 0 : index
    %c0_9 = arith.constant 0 : index
    %11 = vector.load %arg5[%c0_7, %c0_8, %c0_9] : memref<1x4x1xf32, #tpu.memory_space<vmem>>, vector<1x4x1xf32>
    tpu.vector_store %arg5[%c0_7, %c0_8, %c0_9], %10 {strides = array<i32>} : memref<1x4x1xf32, #tpu.memory_space<vmem>>, vector<1x4x1xf32>,
    %c0_10 = arith.constant 0 : index
    %c0_11 = arith.constant 0 : index
    %c0_12 = arith.constant 0 : index
    %12 = vector.load %arg6[%c0_10, %c0_11, %c0_12] : memref<1x4x1xf32, #tpu.memory_space<vmem>>, vector<1x4x1xf32>
    %13 = arith.addf %12, %8 : vector<1x4x1xf32>
    %c0_13 = arith.constant 0 : index
    %c0_14 = arith.constant 0 : index
    %c0_15 = arith.constant 0 : index
    %14 = vector.load %arg6[%c0_13, %c0_14, %c0_15] : memref<1x4x1xf32, #tpu.memory_space<vmem>>, vector<1x4x1xf32>
    tpu.vector_store %arg6[%c0_13, %c0_14, %c0_15], %13 {strides = array<i32>} : memref<1x4x1xf32, #tpu.memory_space<vmem>>, vector<1x4x1xf32>,
    %c0_i32_16 = arith.constant 0 : i32
    %15 = arith.cmpi eq, %arg1, %c0_i32_16 : i32
    %16 = arith.extui %15 : i1 to i32
    %c0_i32_17 = arith.constant 0 : i32
    %17 = arith.cmpi ne, %16, %c0_i32_17 : i32
    scf.if %17 {
      %c0_18 = arith.constant 0 : index
      %c0_19 = arith.constant 0 : index
      %c0_20 = arith.constant 0 : index
      %18 = vector.load %arg5[%c0_18, %c0_19, %c0_20] : memref<1x4x1xf32, #tpu.memory_space<vmem>>, vector<1x4x1xf32>
      %cst_21 = arith.constant dense<0.000000e+00> : vector<1x4xf32>
      %19 = vector.multi_reduction <add>, %18, %cst_21 [2] : vector<1x4x1xf32> to vector<1x4xf32>
      %20 = vector.shape_cast %19 : vector<1x4xf32> to vector<1x4x1xf32>
      %cst_22 = arith.constant 6.250000e-02 : f32
      %21 = vector.broadcast %cst_22 : f32 to vector<1x4x1xf32>
      %22 = arith.mulf %20, %21 : vector<1x4x1xf32>
      %c0_23 = arith.constant 0 : index
      %c0_24 = arith.constant 0 : index
      %c0_25 = arith.constant 0 : index
      %23 = vector.load %arg3[%c0_23, %c0_24, %c0_25] : memref<1x4x1xf32, #tpu.memory_space<vmem>>, vector<1x4x1xf32>
      tpu.vector_store %arg3[%c0_23, %c0_24, %c0_25], %22 {strides = array<i32>} : memref<1x4x1xf32, #tpu.memory_space<vmem>>, vector<1x4x1xf32>,
      %c0_26 = arith.constant 0 : index
      %c0_27 = arith.constant 0 : index
      %c0_28 = arith.constant 0 : index
      %24 = vector.load %arg6[%c0_26, %c0_27, %c0_28] : memref<1x4x1xf32, #tpu.memory_space<vmem>>, vector<1x4x1xf32>
      %cst_29 = arith.constant dense<0.000000e+00> : vector<1x4xf32>
      %25 = vector.multi_reduction <add>, %24, %cst_29 [2] : vector<1x4x1xf32> to vector<1x4xf32>
      %26 = vector.shape_cast %25 : vector<1x4xf32> to vector<1x4x1xf32>
      %cst_30 = arith.constant 1.600000e+01 : f32
      %27 = vector.broadcast %cst_30 : f32 to vector<1x4x1xf32>
      %28 = arith.mulf %27, %22 : vector<1x4x1xf32>
      %29 = arith.mulf %28, %22 : vector<1x4x1xf32>
      %30 = arith.subf %26, %29 : vector<1x4x1xf32>
      %cst_31 = arith.constant 6.250000e-02 : f32
      %31 = vector.broadcast %cst_31 : f32 to vector<1x4x1xf32>
      %32 = arith.mulf %30, %31 : vector<1x4x1xf32>
      %cst_32 = arith.constant 9.99999997E-7 : f32
      %33 = vector.broadcast %cst_32 : f32 to vector<1x4x1xf32>
      %34 = arith.maximumf %32, %33 : vector<1x4x1xf32>
      %35 = math.sqrt %34 : vector<1x4x1xf32>
      %c0_33 = arith.constant 0 : index
      %c0_34 = arith.constant 0 : index
      %c0_35 = arith.constant 0 : index
      %36 = vector.load %arg4[%c0_33, %c0_34, %c0_35] : memref<1x4x1xf32, #tpu.memory_space<vmem>>, vector<1x4x1xf32>
      tpu.vector_store %arg4[%c0_33, %c0_34, %c0_35], %35 {strides = array<i32>} : memref<1x4x1xf32, #tpu.memory_space<vmem>>, vector<1x4x1xf32>,
    } else {
    }
    return
  }
  func.func @transform_0(%arg0: i32, %arg1: i32) -> (i32, i32, i32) {
    %c0_i32 = arith.constant 0 : i32
    %c0_i32_0 = arith.constant 0 : i32
    return %arg0, %c0_i32, %arg1 : i32, i32, i32
  }
  func.func @transform_1(%arg0: i32, %arg1: i32) -> (i32, i32, i32) {
    %c0_i32 = arith.constant 0 : i32
    %c0_i32_0 = arith.constant 0 : i32
    %c0_i32_1 = arith.constant 0 : i32
    return %arg0, %c0_i32, %c0_i32_0 : i32, i32, i32
  }
  func.func @transform_2(%arg0: i32, %arg1: i32) -> (i32, i32, i32) {
    %c0_i32 = arith.constant 0 : i32
    %c0_i32_0 = arith.constant 0 : i32
    %c0_i32_1 = arith.constant 0 : i32
    return %arg0, %c0_i32, %c0_i32_0 : i32, i32, i32
  }
}

</mosaic_0001>

<llo_original>
// kernel: tpu_custom_call.1
$region0: #{tpu_custom_call.1}
  #allocation0 [shape = 'u32[]', space=smem, size = 0x4, offset = 0x4, fixed_abs, tag = 'smem constant byte address 0x4 - core index']
  #allocation1 [shape = 'u32[144,128]{1,0:T(1,128)}', space=vmem, size = 0x12000, scoped, tag = 'internal scratch']
  #allocation2 [shape = 'f32[1,4,1]{2,1,0:T(4,128)}', space=vmem, size = 0x800, scoped, tag = 'scratch operand']
  #allocation3 [shape = 'f32[1,4,1]{2,1,0:T(4,128)}', space=vmem, size = 0x800, scoped, tag = 'scratch operand']
  %s0 = inlined_call_operand.hbm [shape: f32[2,4,16], index: 0, kind: input, shape index: {}]
  %s1 = inlined_call_operand.vmem [shape: f32[2,4,1], index: 1, kind: output, shape index: {0}]
  %s2 = inlined_call_operand.vmem [shape: f32[2,4,1], index: 2, kind: output, shape index: {1}]
  %3 = xla_tuple %s1, %s2
  %s4 = sld [smem:[#allocation0]]
  $region57: #{tpu_custom_call.1} parent=0
    _
  %s6 = ssub.s32 1, %s4
  %s7 = scalar_select 0, %s6, %s4
  $region1: #{tpu_custom_call.1} parent=0
    #allocation4 [shape = 'u8[4096]{0}', space=vmem, size = 0x1000, scoped, tag = 'input window, operand 0']
    #allocation5 [shape = 's32[2]{0}', space=sflag, size = 0x8, scoped, tag = 'scoped memory for tpu_custom_call.1']
    %8 = vsyncpa [#allocation5], 0
    %s9 = scalar_lea.sflag [#allocation5], 1
    %10 = vsyncpa %s9, 0
    loop: start=0, step=1, limit=4
    $region2: #{tpu_custom_call.1} parent=1 // loop_pre_header
      _
    $region3: #{tpu_custom_call.1} parent=1 // loop_header
      %s12 = sphi 0, %s16
      %p13 = scmp.ge.s32.totalorder %s12, 4
      %s19 = sphi 0, %s31
      %s20 = sphi 0, %s27
      %s21 = sphi 0, %s19
      %s22 = sphi 0, %s20
      %s23 = sphi 0, %s21
      %s24 = sphi 0, %s22
      %s36 = sphi 0, %s38
      %s39 = sphi 0, %s36
      %s40 = sphi 0, %s39
      %s56 = sphi 0, %s40
      %s62 = sphi 0, %s64
      %s65 = sphi 0, %s62
      %s66 = sphi 0, %s65
      %s82 = sphi 0, %s66
      %s88 = sphi 0, %s90
      %s91 = sphi 0, %s88
      %s92 = sphi 0, %s91
      %s108 = sphi 0, %s92
    $region4: #{tpu_custom_call.1} parent=1 // loop_header_branch
      %15 = sbr.rel (%p13) target = $region8
    $region5: #{tpu_custom_call.1} parent=1 // loop_body
      %s17 = ssub.s32 %s12, 1
      %s18 = ssub.s32 %s12, 2
      %s25 = sadd.s32 1, %s20
      %p26 = scmp.ge.s32.totalorder %s25, 1
      %s27 = scalar_select %p26, 0, %s25
      %s28 = sadd.s32 1, %s19
      %s29 = scalar_select %p26, %s28, %s19
      %p30 = scmp.ge.s32.totalorder %s29, 2
      %s31 = scalar_select %p30, 0, %s29
      %s32 = ssub.s32 %s19, %s31
      %s33 = ssub.s32 %s20, %s27
      %s34 = sor.u32 %s32, %s33
      %p35 = scmp.eq.s32.totalorder %s34, 0
      %s37 = sadd.s32 %s36, 1
      %s38 = scalar_select %p35, %s36, %s37
      %p41 = pneg %p35
      %p42 = scmp.eq.s32.totalorder %s12, 1
      %p43 = por %p41, %p42
      %p44 = scmp.ne.s32.totalorder %s36, %s39
      %p45 = scmp.eq.s32.totalorder %s12, 0
      %p46 = por %p44, %p45
      %p47 = scmp.ne.s32.totalorder %s36, %s39
      %p48 = scmp.eq.s32.totalorder %s17, 1
      %p49 = por %p47, %p48
      %p50 = scmp.ne.s32.totalorder %s39, %s40
      %p51 = scmp.eq.s32.totalorder %s17, 0
      %p52 = por %p50, %p51
      %p53 = scmp.ne.s32.totalorder %s39, %s40
      %p54 = scmp.eq.s32.totalorder %s18, 1
      %p55 = por %p53, %p54
      %p57 = scmp.ne.s32.totalorder %s40, %s56
      %p58 = scmp.eq.s32.totalorder %s18, 0
      %p59 = por %p57, %p58
      %s60 = ssub.s32 %s19, %s31
      %p61 = scmp.eq.s32.totalorder %s60, 0
      %s63 = sadd.s32 %s62, 1
      %s64 = scalar_select %p61, %s62, %s63
      %p67 = pneg %p61
      %p68 = scmp.eq.s32.totalorder %s12, 1
      %p69 = por %p67, %p68
      %p70 = scmp.ne.s32.totalorder %s62, %s65
      %p71 = scmp.eq.s32.totalorder %s12, 0
      %p72 = por %p70, %p71
      %p73 = scmp.ne.s32.totalorder %s62, %s65
      %p74 = scmp.eq.s32.totalorder %s17, 1
      %p75 = por %p73, %p74
      %p76 = scmp.ne.s32.totalorder %s65, %s66
      %p77 = scmp.eq.s32.totalorder %s17, 0
      %p78 = por %p76, %p77
      %p79 = scmp.ne.s32.totalorder %s65, %s66
      %p80 = scmp.eq.s32.totalorder %s18, 1
      %p81 = por %p79, %p80
      %p83 = scmp.ne.s32.totalorder %s66, %s82
      %p84 = scmp.eq.s32.totalorder %s18, 0
      %p85 = por %p83, %p84
      %s86 = ssub.s32 %s19, %s31
      %p87 = scmp.eq.s32.totalorder %s86, 0
      %s89 = sadd.s32 %s88, 1
      %s90 = scalar_select %p87, %s88, %s89
      %p93 = pneg %p87
      %p94 = scmp.eq.s32.totalorder %s12, 1
      %p95 = por %p93, %p94
      %p96 = scmp.ne.s32.totalorder %s88, %s91
      %p97 = scmp.eq.s32.totalorder %s12, 0
      %p98 = por %p96, %p97
      %p99 = scmp.ne.s32.totalorder %s88, %s91
      %p100 = scmp.eq.s32.totalorder %s17, 1
      %p101 = por %p99, %p100
      %p102 = scmp.ne.s32.totalorder %s91, %s92
      %p103 = scmp.eq.s32.totalorder %s17, 0
      %p104 = por %p102, %p103
      %p105 = scmp.ne.s32.totalorder %s91, %s92
      %p106 = scmp.eq.s32.totalorder %s18, 1
      %p107 = por %p105, %p106
      %p109 = scmp.ne.s32.totalorder %s92, %s108
      %p110 = scmp.eq.s32.totalorder %s18, 0
      %p111 = por %p109, %p110
      %p112 = scmp.le.s32.totalorder 1, %s12
      %p113 = scmp.lt.s32.totalorder %s12, 3
      %p114 = pnand %p112, %p113
      %p115 = pneg %p114
      // Predicated region
      $region9: #{tpu_custom_call.1} parent=5 // pred_check
        _
      $region10: #{tpu_custom_call.1} parent=5 // pred_check_branch
        %117 = sbr.rel (%p114) target = $region12
      $region11: #{tpu_custom_call.1} parent=5 // pred_region
        %s118 = ssub.s32 %s12, 1
      $region12: #{tpu_custom_call.1} parent=5 // pred_fallthru
        _
      %p119 = scmp.lt.s32.totalorder %s12, 2
      // Predicated region
      $region13: #{tpu_custom_call.1} parent=5 // pred_check
        %p120 = pneg %p119
      $region14: #{tpu_custom_call.1} parent=5 // pred_check_branch
        %122 = sbr.rel (%p120) target = $region16
      $region15: #{tpu_custom_call.1} parent=5 // pred_region
        // Predicated region
        $region17: #{tpu_custom_call.1} parent=15 // pred_check
          %p123 = pneg %p46
        $region18: #{tpu_custom_call.1} parent=15 // pred_check_branch
          %125 = sbr.rel (%p123) target = $region20
        $region19: #{tpu_custom_call.1} parent=15 // pred_region
          %s126 = sand.u32 %s36, 1
          %s127 = scalar_lea.sflag [#allocation5], %s126
          %s128 = sand.u32 %s36, 1
          %s129 = smul.addr %s128, 4
          %s130 = scalar_lea.vmem [#allocation4], %s129
          %s132 = ssub.s32 64, 64
          %133 = vsyncadd %s127, %s132
          %s134 = sadd.s32 %s20, %s19
          %s135 = smul.addr %s134, 64
          %s136 = scalar_lea.hbm %s0, %s135
          %s138 = sshll.u32 %s130, 4
          %s139 = int_to_ptr.vmem [resolvable:$true] %s138
          %141 = dma.hbm_to_vmem [thread:$0]  %s136, 64, %s139, %s127
        $region20: #{tpu_custom_call.1} parent=15 // pred_fallthru
          _
      $region16: #{tpu_custom_call.1} parent=5 // pred_fallthru
        _
      %p142 = scmp.le.s32.totalorder 1, %s12
      %p143 = scmp.lt.s32.totalorder %s12, 3
      %p144 = pnand %p142, %p143
      %p145 = pneg %p144
      // Predicated region
      $region21: #{tpu_custom_call.1} parent=5 // pred_check
        _
      $region22: #{tpu_custom_call.1} parent=5 // pred_check_branch
        %147 = sbr.rel (%p144) target = $region24
      $region23: #{tpu_custom_call.1} parent=5 // pred_region
        %s148 = ssub.s32 %s12, 1
        %s149 = sand.u32 %s39, 1
        %s150 = scalar_lea.sflag [#allocation5], %s149
        %s151 = sand.u32 %s39, 1
        %s152 = smul.addr %s151, 4
        %s153 = scalar_lea.vmem [#allocation4], %s152
        // Predicated region
        $region25: #{tpu_custom_call.1} parent=23 // pred_check
          %p154 = pneg %p52
        $region26: #{tpu_custom_call.1} parent=23 // pred_check_branch
          %156 = sbr.rel (%p154) target = $region28
        $region27: #{tpu_custom_call.1} parent=23 // pred_region
          %157 = dma.done %s150, 64
        $region28: #{tpu_custom_call.1} parent=23 // pred_fallthru
          _
        %s158 = sand.u32 %s39, 1
        %s159 = scalar_lea.sflag [#allocation5], %s158
        %s160 = sand.u32 %s39, 1
        %s161 = smul.addr %s160, 4
        %s162 = scalar_lea.vmem [#allocation4], %s161
        %p163 = pneg %p52
        %p164 = pneg %p49
        %p165 = pneg %p78
        %p166 = pneg %p75
        %p167 = scmp.lt.s32.totalorder %s21, 1
        %s168 = scalar_select %p167, %s21, 1
        %s169 = smul.addr %s168, 4
        %s170 = scalar_lea.vmem %s1, %s169
        %p171 = pneg %p104
        %p172 = pneg %p101
        %p173 = scmp.lt.s32.totalorder %s21, 1
        %s174 = scalar_select %p173, %s21, 1
        %s175 = smul.addr %s174, 4
        %s176 = scalar_lea.vmem %s2, %s175
        %p177 = scmp.lt.s32.totalorder %s21, 1
        %s178 = scalar_select %p177, %s21, 1
        %s179 = smul.addr %s178, 4
        %s180 = scalar_lea.vmem %s1, %s179
        %p181 = scmp.lt.s32.totalorder %s21, 1
        %s182 = scalar_select %p181, %s21, 1
        %s183 = smul.addr %s182, 4
        %s184 = scalar_lea.vmem %s2, %s183
        %p185 = scmp.eq.s32.totalorder %s22, 0
        // Predicated region
        $region29: #{tpu_custom_call.1} parent=23 // pred_check
          %p186 = pneg %p185
        $region30: #{tpu_custom_call.1} parent=23 // pred_check_branch
          %188 = sbr.rel (%p186) target = $region32
        $region31: #{tpu_custom_call.1} parent=23 // pred_region
          %vm189 = vcmask 3072
          %190 = vst.msk [vmem:[#allocation2] sm:$0xf] %vm189, 0.0
          %191 = vst.msk [vmem:[#allocation3] sm:$0xf] %vm189, 0.0
        $region32: #{tpu_custom_call.1} parent=23 // pred_fallthru
          _
        %v192 = vld [vmem:[%s153] sm:$0xf]
        %vm193 = vcmask 125952
        %v194 = vsel %vm193, %v192, 0.0
        %195 = vadd.xlane.f32.xlu0 %v194
        %v196 = vpop.xlane.xlu0 %195
        %v197 = vmul.f32 %v192, %v192
        %v198 = vsel %vm193, %v197, 0.0
        %199 = vadd.xlane.f32.xlu0 %v198
        %v200 = vpop.xlane.xlu0 %199
        %v201 = vld [vmem:[#allocation2] sm:$0xf]
        %v202 = vadd.f32 %v201, %v196
        %vm203 = vcmask 3072
        %204 = vst.msk [vmem:[#allocation2] sm:$0xf] %vm203, %v202
        %v205 = vld [vmem:[#allocation3] sm:$0xf]
        %v206 = vadd.f32 %v205, %v200
        %207 = vst.msk [vmem:[#allocation3] sm:$0xf] %vm203, %v206
        // Predicated region
        $region33: #{tpu_custom_call.1} parent=23 // pred_check
          %p208 = pneg %p185
        $region34: #{tpu_custom_call.1} parent=23 // pred_check_branch
          %210 = sbr.rel (%p208) target = $region36
        $region35: #{tpu_custom_call.1} parent=23 // pred_region
          %v211 = vld [vmem:[#allocation2] sm:$0xf]
          %v212 = vadd.f32 %v211, 0.0
          %v213 = vmul.f32 %v212, 0.0625
          %214 = vst.msk [vmem:[%s180] sm:$0xf] %vm203, %v213
          %v215 = vld [vmem:[#allocation3] sm:$0xf]
          %v216 = vadd.f32 %v215, 0.0
          %v217 = vmul.f32 %v213, 16.0
          %v218 = vmul.f32 %v217, %v213
          %v219 = vsub.f32 %v216, %v218
          %v220 = vmul.f32 %v219, 0.0625
          %v221 = vmax.f32 %v220, 1e-06
          %v222 = vrsqrt.pop %v221
          %v223 = vmul.f32 %v221, %v222
          %vm224 = vcmp.eq.f32.partialorder %v221, inf
          %v225 = vsel %vm224, %v221, %v223
          %vm226 = vcmp.eq.f32.partialorder %v221, 0.0
          %v227 = vand.u32 %v221, 2147483648
          %v228 = vsel %vm226, %v227, %v225
          %229 = vst.msk [vmem:[%s184] sm:$0xf] %vm203, %v228
        $region36: #{tpu_custom_call.1} parent=23 // pred_fallthru
          _
        %p230 = scmp.lt.s32.totalorder %s21, 1
        %s231 = scalar_select %p230, %s21, 1
        %s232 = smul.addr %s231, 4
        %s233 = scalar_lea.vmem %s1, %s232
        %p234 = scmp.lt.s32.totalorder %s21, 1
        %s235 = scalar_select %p234, %s21, 1
        %s236 = smul.addr %s235, 4
        %s237 = scalar_lea.vmem %s2, %s236
        // Predicated region
        $region37: #{tpu_custom_call.1} parent=23 // pred_check
          %p238 = pneg %p75
        $region38: #{tpu_custom_call.1} parent=23 // pred_check_branch
          %240 = sbr.rel (%p238) target = $region40
        $region39: #{tpu_custom_call.1} parent=23 // pred_region
          _
        $region40: #{tpu_custom_call.1} parent=23 // pred_fallthru
          _
        // Predicated region
        $region41: #{tpu_custom_call.1} parent=23 // pred_check
          %p241 = pneg %p101
        $region42: #{tpu_custom_call.1} parent=23 // pred_check_branch
          %243 = sbr.rel (%p241) target = $region44
        $region43: #{tpu_custom_call.1} parent=23 // pred_region
          _
        $region44: #{tpu_custom_call.1} parent=23 // pred_fallthru
          _
      $region24: #{tpu_custom_call.1} parent=5 // pred_fallthru
        _
      %p244 = scmp.le.s32.totalorder 2, %s12
      // Predicated region
      $region45: #{tpu_custom_call.1} parent=5 // pred_check
        %p245 = pneg %p244
      $region46: #{tpu_custom_call.1} parent=5 // pred_check_branch
        %247 = sbr.rel (%p245) target = $region48
      $region47: #{tpu_custom_call.1} parent=5 // pred_region
        %s248 = ssub.s32 %s12, 2
        // Predicated region
        $region49: #{tpu_custom_call.1} parent=47 // pred_check
          %p249 = pneg %p81
        $region50: #{tpu_custom_call.1} parent=47 // pred_check_branch
          %251 = sbr.rel (%p249) target = $region52
        $region51: #{tpu_custom_call.1} parent=47 // pred_region
          %p252 = scmp.lt.s32.totalorder %s23, 1
          %s253 = scalar_select %p252, %s23, 1
          %s254 = smul.addr %s253, 4
          %s255 = scalar_lea.vmem %s1, %s254
        $region52: #{tpu_custom_call.1} parent=47 // pred_fallthru
          _
        // Predicated region
        $region53: #{tpu_custom_call.1} parent=47 // pred_check
          %p256 = pneg %p107
        $region54: #{tpu_custom_call.1} parent=47 // pred_check_branch
          %258 = sbr.rel (%p256) target = $region56
        $region55: #{tpu_custom_call.1} parent=47 // pred_region
          %p259 = scmp.lt.s32.totalorder %s23, 1
          %s260 = scalar_select %p259, %s23, 1
          %s261 = smul.addr %s260, 4
          %s262 = scalar_lea.vmem %s2, %s261
        $region56: #{tpu_custom_call.1} parent=47 // pred_fallthru
          _
      $region48: #{tpu_custom_call.1} parent=5 // pred_fallthru
        _
    $region6: #{tpu_custom_call.1} parent=1 // loop_footer
      %s16 = sadd.s32 1, %s12
    $region7: #{tpu_custom_call.1} parent=1 // loop_footer_branch
      %11 = sbr.rel target = $region3
    $region8: #{tpu_custom_call.1} parent=1 // loop_exit
      _
    %263 = vsyncpa [#allocation5], 1
    %s264 = scalar_lea.sflag [#allocation5], 1
    %265 = vsyncpa %s264, 1

</llo_original>
